<compile_context>
chip_gen: v5e
topology: v5e:2x2
jax: 0.10.0
libtpu: 0.0.40
codegen_flags: <defaults>
</compile_context>

<pallas_src>
import numpy as np
import jax
import jax.numpy as jnp
from jax import lax
from jax.experimental import pallas as pl
from jax.experimental.pallas import tpu as pltpu

SELU_ALPHA = 1.6732632423543772
SELU_SCALE = 1.0507009873554805


def _selu(x):
    # exp() only sees the non-positive branch -> no inf on the unselected side.
    return SELU_SCALE * jnp.where(
        x > 0, x, SELU_ALPHA * (jnp.exp(jnp.minimum(x, 0.0)) - 1.0))


def _round_up(x, m):
    return (x + m - 1) // m * m


def _choose_tile(B, tb):
    """16-aligned batch tile (valid for f32 sublane=8 and bf16 sublane=16).

    Large tiles amortize the ~0.35us per-grid-step overhead; capping at
    ~ceil(B/2) keeps >= 2 tiles so a v7x megacore can split the parallel axis.
    """
    if B <= 32:
        return _round_up(B, 16)
    half = _round_up((B + 1) // 2, 16)
    return min(_round_up(tb, 16), half)


def critic_kernel(s_ref, a_ref, ws_ref, wa_ref, bsa_ref, w1_ref, b1_ref,
                  w2_ref, b2_ref, out_ref):
    mm_dtype = ws_ref.dtype
    # fcs/fca fused: two matmuls against the split block-diagonal [*, H1]
    # weights; their sum is exactly dot(cat([s, a], 1), Wsa_blockdiag).
    s = s_ref[...].astype(mm_dtype)                                   # [TB, ns]
    a = a_ref[...].astype(mm_dtype)                                   # [TB, na]
    h1 = (jnp.dot(s, ws_ref[...], preferred_element_type=jnp.float32)
          + jnp.dot(a, wa_ref[...], preferred_element_type=jnp.float32)
          + bsa_ref[...])
    h1 = _selu(h1)                                                    # [TB, H1] f32

    # fc1: weight already stored as [H1, H2]; fused h1 columns are already
    # ordered [s'..., a'...] so no slicing / concat is needed.
    h2 = jnp.dot(h1.astype(w1_ref.dtype), w1_ref[...],
                 preferred_element_type=jnp.float32) + b1_ref[...]
    h2 = _selu(h2)                                                    # [TB, H2] f32

    # fc2 (single output unit): contract H2 of the [1, H2] weight row with H2
    # of h2 -> lane-dense [1, TB] result (no [TB, 1] masked-store output).
    q = lax.dot_general(w2_ref[...], h2, (((1,), (1,)), ((), ())),
                        preferred_element_type=jnp.float32)           # [1, TB]
    out_ref[...] = q + b2_ref[0, 0]                                   # b2 scalar (SMEM)


def prepare_params(params, matmul_dtype=jnp.float32):
    """One-time host-side re-layout of the PyTorch-convention parameters."""
    ws_t = params["ws"].T.astype(jnp.float32)      # [nb_status,  H1/2]
    wa_t = params["wa"].T.astype(jnp.float32)      # [nb_actions, H1/2]
    ns, h1h = ws_t.shape
    na = wa_t.shape[0]
    h1 = 2 * h1h
    # Split halves of the block-diagonal [ns+na, H1] weight (so s and a can be
    # fed as two separate inputs with no host-side concat of the batch).
    ws_hat = jnp.zeros((ns, h1), jnp.float32).at[:, :h1h].set(ws_t)   # [ns, H1]
    wa_hat = jnp.zeros((na, h1), jnp.float32).at[:, h1h:].set(wa_t)   # [na, H1]
    return {
        "ws_hat": ws_hat.astype(matmul_dtype),
        "wa_hat": wa_hat.astype(matmul_dtype),
        "bsa": jnp.concatenate([params["bs"], params["ba"]], axis=1).astype(jnp.float32),  # [1, H1]
        "w1t": params["w1"].T.astype(matmul_dtype),                   # [H1, H2]
        "b1": params["b1"].astype(jnp.float32),                       # [1, H2]
        "w2": params["w2"].astype(jnp.float32),                       # [1, H2] row
        "b2": params["b2"].reshape(1, 1).astype(jnp.float32),         # SMEM scalar
    }


def critic_forward(s, a, prep, *, tb=2048):
    """q = Critic((s, a)).  s: [B, nb_status], a: [B, nb_actions] -> [B, 1].

    s / a may be f32 or bf16 (bf16 end-to-end halves the dominant HBM read on
    v6e/v7x); any cast to the matmul dtype happens inside the kernel on the VPU.
    """
    B, ns = s.shape
    na = a.shape[1]
    h1 = prep["ws_hat"].shape[1]
    h2 = prep["w1t"].shape[1]

    TB = _choose_tile(B, tb)
    Bp = _round_up(B, TB)
    if Bp != B:  # only copy/pad when the batch is genuinely ragged
        s = jnp.pad(s, ((0, Bp - B), (0, 0)))
        a = jnp.pad(a, ((0, Bp - B), (0, 0)))
    n_tiles = Bp // TB

    out = pl.pallas_call(
        critic_kernel,
        out_shape=jax.ShapeDtypeStruct((n_tiles, TB), jnp.float32),   # lane-dense
        grid=(n_tiles,),
        in_specs=[
            pl.BlockSpec((TB, ns), lambda i: (i, 0)),                 # s (batch tiled)
            pl.BlockSpec((TB, na), lambda i: (i, 0)),                 # a (batch tiled)
            pl.BlockSpec((ns, h1), lambda i: (0, 0)),                 # Wsa[:ns]
            pl.BlockSpec((na, h1), lambda i: (0, 0)),                 # Wsa[ns:]
            pl.BlockSpec((1, h1), lambda i: (0, 0)),                  # bsa
            pl.BlockSpec((h1, h2), lambda i: (0, 0)),                 # W1^T
            pl.BlockSpec((1, h2), lambda i: (0, 0)),                  # b1
            pl.BlockSpec((1, h2), lambda i: (0, 0)),                  # w2 row
            pl.BlockSpec(memory_space=pltpu.MemorySpace.SMEM),        # b2 scalar
        ],
        out_specs=pl.BlockSpec((1, TB), lambda i: (i, 0)),
        compiler_params=pltpu.CompilerParams(
            dimension_semantics=("parallel",)),
    )(s, a, prep["ws_hat"], prep["wa_hat"], prep["bsa"],
      prep["w1t"], prep["b1"], prep["w2"], prep["b2"])

    # (n_tiles, TB) -> (B, 1): free layout plumbing in the wrapper.
    return out.reshape(Bp, 1)[:B]


def init_params(key, nb_status, nb_actions, hidden1=64, hidden2=32, init_w=3e-4):
    """Deterministic init mirroring the PyTorch fanin_init / uniform(-init_w, init_w)."""
    h1h = hidden1 // 2
    keys = jax.random.split(key, 8)

    def fanin_uniform(k, shape):
        fanin = shape[0]  # matches fanin_init default: fanin = size[0]
        v = 1.0 / np.sqrt(fanin)
        return jax.random.uniform(k, shape, jnp.float32, -v, v)

    def bias_uniform(k, fan_in, n):
        # PyTorch nn.Linear default bias init: U(-1/sqrt(fan_in), 1/sqrt(fan_in))
        v = 1.0 / np.sqrt(fan_in)
        return jax.random.uniform(k, (1, n), jnp.float32, -v, v)

    return {
        "ws": fanin_uniform(keys[0], (h1h, nb_status)),
        "bs": bias_uniform(keys[1], nb_status, h1h),
        "wa": fanin_uniform(keys[2], (h1h, nb_actions)),
        "ba": bias_uniform(keys[3], nb_actions, h1h),
        "w1": jax.random.uniform(keys[4], (hidden2, hidden1), jnp.float32, -init_w, init_w),
        "b1": bias_uniform(keys[5], hidden1, hidden2),
        "w2": jax.random.uniform(keys[6], (1, hidden2), jnp.float32, -init_w, init_w),
        "b2": bias_uniform(keys[7], hidden2, 1),
    }


def reference_forward(s, a, p):
    """Plain-JAX reference (matches the PyTorch forward exactly, f32)."""
    def selu(x):
        return SELU_SCALE * jnp.where(x > 0, x, SELU_ALPHA * (jnp.exp(x) - 1.0))
    sh = selu(s @ p["ws"].T + p["bs"])
    ah = selu(a @ p["wa"].T + p["ba"])
    h = selu(jnp.concatenate([sh, ah], axis=1) @ p["w1"].T + p["b1"])
    return h @ p["w2"].T + p["b2"]


if __name__ == "__main__":
    B, NB_STATUS, NB_ACTIONS = 8, 32, 16
    HIDDEN1, HIDDEN2 = 64, 32

    key = jax.random.PRNGKey(0)
    k_s, k_a, k_p = jax.random.split(key, 3)
    s = jax.random.normal(k_s, (B, NB_STATUS), jnp.float32)
    a = jax.random.normal(k_a, (B, NB_ACTIONS), jnp.float32)
    params = init_params(k_p, NB_STATUS, NB_ACTIONS, HIDDEN1, HIDDEN2)

    q_ref = reference_forward(s, a, params)

    # float32 MXU path (numerically faithful to the PyTorch forward).
    prep_f32 = prepare_params(params, jnp.float32)
    q = jax.block_until_ready(critic_forward(s, a, prep_f32))
    np.testing.assert_allclose(np.asarray(q), np.asarray(q_ref), rtol=1e-5, atol=1e-5)

    # bf16 MXU path (recommended on v6e / v7x): bf16 matmul inputs, f32
    # accumulation; SELU / biases / final reduce stay f32.  On v5e keep f32.
    prep_bf16 = prepare_params(params, jnp.bfloat16)
    q16 = jax.block_until_ready(critic_forward(s, a, prep_bf16))
    np.testing.assert_allclose(np.asarray(q16), np.asarray(q_ref), rtol=5e-2, atol=5e-3)

    # Larger, multi-tile batch (exercises the pipelined / multi-core grid path,
    # power-of-two batch so no pad copy is emitted).
    B2 = 1024
    s2 = jax.random.normal(jax.random.PRNGKey(1), (B2, NB_STATUS), jnp.float32)
    a2 = jax.random.normal(jax.random.PRNGKey(2), (B2, NB_ACTIONS), jnp.float32)
    q2 = jax.block_until_ready(critic_forward(s2, a2, prep_f32))
    q2_ref = reference_forward(s2, a2, params)
    np.testing.assert_allclose(np.asarray(q2), np.asarray(q2_ref), rtol=1e-5, atol=1e-5)

    print("KERNEL_OK")
</pallas_src>

<mosaic_0001>
module attributes {stable_mosaic.version = 11 : i64} {
  func.func @critic_kernel(%arg0: i32, %arg1: memref<16x32xf32, #tpu.memory_space<vmem>>, %arg2: memref<16x16xf32, #tpu.memory_space<vmem>>, %arg3: memref<32x64xf32, #tpu.memory_space<vmem>>, %arg4: memref<16x64xf32, #tpu.memory_space<vmem>>, %arg5: memref<1x64xf32, #tpu.memory_space<vmem>>, %arg6: memref<64x32xf32, #tpu.memory_space<vmem>>, %arg7: memref<1x32xf32, #tpu.memory_space<vmem>>, %arg8: memref<1x32xf32, #tpu.memory_space<vmem>>, %arg9: memref<1x1xf32, #tpu.memory_space<smem>>, %arg10: memref<1x16xf32, #tpu.memory_space<vmem>>) attributes {dimension_semantics = [#tpu.dimension_semantics<parallel>], iteration_bounds = array<i64: 1>, scalar_prefetch = 0 : i64, scratch_operands = 0 : i64, tpu.core_type = #tpu.core_type<tc>, window_params = [{transform_indices = @transform_0, window_bounds = array<i64: 16, 32>}, {transform_indices = @transform_1, window_bounds = array<i64: 16, 16>}, {pipeline_mode = #tpu.pipeline_mode<synchronous>, transform_indices = @transform_2, window_bounds = array<i64: 32, 64>}, {pipeline_mode = #tpu.pipeline_mode<synchronous>, transform_indices = @transform_3, window_bounds = array<i64: 16, 64>}, {pipeline_mode = #tpu.pipeline_mode<synchronous>, transform_indices = @transform_4, window_bounds = array<i64: 1, 64>}, {pipeline_mode = #tpu.pipeline_mode<synchronous>, transform_indices = @transform_5, window_bounds = array<i64: 64, 32>}, {pipeline_mode = #tpu.pipeline_mode<synchronous>, transform_indices = @transform_6, window_bounds = array<i64: 1, 32>}, {pipeline_mode = #tpu.pipeline_mode<synchronous>, transform_indices = @transform_7, window_bounds = array<i64: 1, 32>}, {transform_indices = @transform_8, window_bounds = array<i64: 1, 1>}, {transform_indices = @transform_9, window_bounds = array<i64: 1, 16>}]} {
    %c0 = arith.constant 0 : index
    %c0_0 = arith.constant 0 : index
    %0 = vector.load %arg1[%c0, %c0_0] : memref<16x32xf32, #tpu.memory_space<vmem>>, vector<16x32xf32>
    %c0_1 = arith.constant 0 : index
    %c0_2 = arith.constant 0 : index
    %1 = vector.load %arg2[%c0_1, %c0_2] : memref<16x16xf32, #tpu.memory_space<vmem>>, vector<16x16xf32>
    %c0_3 = arith.constant 0 : index
    %c0_4 = arith.constant 0 : index
    %2 = vector.load %arg3[%c0_3, %c0_4] : memref<32x64xf32, #tpu.memory_space<vmem>>, vector<32x64xf32>
    %cst = arith.constant dense<0.000000e+00> : vector<16x64xf32>
    %3 = tpu.matmul %0, %2, %cst {dimension_numbers = #tpu.dot_dimension_numbers<[1], [0], [0], [1], [0, 0, 1, 1], [], []>} : vector<16x32xf32>, vector<32x64xf32>, vector<16x64xf32> -> vector<16x64xf32>
    %c0_5 = arith.constant 0 : index
    %c0_6 = arith.constant 0 : index
    %4 = vector.load %arg4[%c0_5, %c0_6] : memref<16x64xf32, #tpu.memory_space<vmem>>, vector<16x64xf32>
    %cst_7 = arith.constant dense<0.000000e+00> : vector<16x64xf32>
    %5 = tpu.matmul %1, %4, %cst_7 {dimension_numbers = #tpu.dot_dimension_numbers<[1], [0], [0], [1], [0, 0, 1, 1], [], []>} : vector<16x16xf32>, vector<16x64xf32>, vector<16x64xf32> -> vector<16x64xf32>
    %6 = arith.addf %3, %5 : vector<16x64xf32>
    %c0_8 = arith.constant 0 : index
    %c0_9 = arith.constant 0 : index
    %7 = vector.load %arg5[%c0_8, %c0_9] : memref<1x64xf32, #tpu.memory_space<vmem>>, vector<1x64xf32>
    %8 = vector.broadcast %7 : vector<1x64xf32> to vector<16x64xf32>
    %9 = arith.addf %6, %8 : vector<16x64xf32>
    %cst_10 = arith.constant 0.000000e+00 : f32
    %10 = vector.broadcast %cst_10 : f32 to vector<16x64xf32>
    %11 = arith.cmpf ogt, %9, %10 : vector<16x64xf32>
    %cst_11 = arith.constant 0.000000e+00 : f32
    %12 = vector.broadcast %cst_11 : f32 to vector<16x64xf32>
    %13 = arith.minimumf %9, %12 : vector<16x64xf32>
    %14 = math.exp %13 : vector<16x64xf32>
    %cst_12 = arith.constant 1.000000e+00 : f32
    %15 = vector.broadcast %cst_12 : f32 to vector<16x64xf32>
    %16 = arith.subf %14, %15 : vector<16x64xf32>
    %cst_13 = arith.constant 1.67326319 : f32
    %17 = vector.broadcast %cst_13 : f32 to vector<16x64xf32>
    %18 = arith.mulf %17, %16 : vector<16x64xf32>
    %19 = arith.select %11, %9, %18 : vector<16x64xi1>, vector<16x64xf32>
    %cst_14 = arith.constant 1.05070102 : f32
    %20 = vector.broadcast %cst_14 : f32 to vector<16x64xf32>
    %21 = arith.mulf %20, %19 : vector<16x64xf32>
    %c0_15 = arith.constant 0 : index
    %c0_16 = arith.constant 0 : index
    %22 = vector.load %arg6[%c0_15, %c0_16] : memref<64x32xf32, #tpu.memory_space<vmem>>, vector<64x32xf32>
    %cst_17 = arith.constant dense<0.000000e+00> : vector<16x32xf32>
    %23 = tpu.matmul %21, %22, %cst_17 {dimension_numbers = #tpu.dot_dimension_numbers<[1], [0], [0], [1], [0, 0, 1, 1], [], []>} : vector<16x64xf32>, vector<64x32xf32>, vector<16x32xf32> -> vector<16x32xf32>
    %c0_18 = arith.constant 0 : index
    %c0_19 = arith.constant 0 : index
    %24 = vector.load %arg7[%c0_18, %c0_19] : memref<1x32xf32, #tpu.memory_space<vmem>>, vector<1x32xf32>
    %25 = vector.broadcast %24 : vector<1x32xf32> to vector<16x32xf32>
    %26 = arith.addf %23, %25 : vector<16x32xf32>
    %cst_20 = arith.constant 0.000000e+00 : f32
    %27 = vector.broadcast %cst_20 : f32 to vector<16x32xf32>
    %28 = arith.cmpf ogt, %26, %27 : vector<16x32xf32>
    %cst_21 = arith.constant 0.000000e+00 : f32
    %29 = vector.broadcast %cst_21 : f32 to vector<16x32xf32>
    %30 = arith.minimumf %26, %29 : vector<16x32xf32>
    %31 = math.exp %30 : vector<16x32xf32>
    %cst_22 = arith.constant 1.000000e+00 : f32
    %32 = vector.broadcast %cst_22 : f32 to vector<16x32xf32>
    %33 = arith.subf %31, %32 : vector<16x32xf32>
    %cst_23 = arith.constant 1.67326319 : f32
    %34 = vector.broadcast %cst_23 : f32 to vector<16x32xf32>
    %35 = arith.mulf %34, %33 : vector<16x32xf32>
    %36 = arith.select %28, %26, %35 : vector<16x32xi1>, vector<16x32xf32>
    %cst_24 = arith.constant 1.05070102 : f32
    %37 = vector.broadcast %cst_24 : f32 to vector<16x32xf32>
    %38 = arith.mulf %37, %36 : vector<16x32xf32>
    %c0_25 = arith.constant 0 : index
    %c0_26 = arith.constant 0 : index
    %39 = vector.load %arg8[%c0_25, %c0_26] : memref<1x32xf32, #tpu.memory_space<vmem>>, vector<1x32xf32>
    %cst_27 = arith.constant dense<0.000000e+00> : vector<1x16xf32>
    %40 = tpu.matmul %39, %38, %cst_27 {dimension_numbers = #tpu.dot_dimension_numbers<[1], [1], [0], [0], [0, 0, 1, 0], [], []>} : vector<1x32xf32>, vector<16x32xf32>, vector<1x16xf32> -> vector<1x16xf32>
    %c0_28 = arith.constant 0 : index
    %c0_29 = arith.constant 0 : index
    %41 = memref.load %arg9[%c0_28, %c0_29] : memref<1x1xf32, #tpu.memory_space<smem>>
    %42 = vector.broadcast %41 : f32 to vector<1x16xf32>
    %43 = arith.addf %40, %42 : vector<1x16xf32>
    %c0_30 = arith.constant 0 : index
    %c0_31 = arith.constant 0 : index
    %44 = vector.load %arg10[%c0_30, %c0_31] : memref<1x16xf32, #tpu.memory_space<vmem>>, vector<1x16xf32>
    tpu.vector_store %arg10[%c0_30, %c0_31], %43 {strides = array<i32>} : memref<1x16xf32, #tpu.memory_space<vmem>>, vector<1x16xf32>,
    return
  }
  func.func @transform_0(%arg0: i32) -> (i32, i32) {
    %c0_i32 = arith.constant 0 : i32
    %c0_i32_0 = arith.constant 0 : i32
    return %arg0, %c0_i32 : i32, i32
  }
  func.func @transform_1(%arg0: i32) -> (i32, i32) {
    %c0_i32 = arith.constant 0 : i32
    %c0_i32_0 = arith.constant 0 : i32
    return %arg0, %c0_i32 : i32, i32
  }
  func.func @transform_2(%arg0: i32) -> (i32, i32) {
    %c0_i32 = arith.constant 0 : i32
    %c0_i32_0 = arith.constant 0 : i32
    %c0_i32_1 = arith.constant 0 : i32
    return %c0_i32, %c0_i32_0 : i32, i32
  }
  func.func @transform_3(%arg0: i32) -> (i32, i32) {
    %c0_i32 = arith.constant 0 : i32
    %c0_i32_0 = arith.constant 0 : i32
    %c0_i32_1 = arith.constant 0 : i32
    return %c0_i32, %c0_i32_0 : i32, i32
  }
  func.func @transform_4(%arg0: i32) -> (i32, i32) {
    %c0_i32 = arith.constant 0 : i32
    %c0_i32_0 = arith.constant 0 : i32
    %c0_i32_1 = arith.constant 0 : i32
    return %c0_i32, %c0_i32_0 : i32, i32
  }
  func.func @transform_5(%arg0: i32) -> (i32, i32) {
    %c0_i32 = arith.constant 0 : i32
    %c0_i32_0 = arith.constant 0 : i32
    %c0_i32_1 = arith.constant 0 : i32
    return %c0_i32, %c0_i32_0 : i32, i32
  }
  func.func @transform_6(%arg0: i32) -> (i32, i32) {
    %c0_i32 = arith.constant 0 : i32
    %c0_i32_0 = arith.constant 0 : i32
    %c0_i32_1 = arith.constant 0 : i32
    return %c0_i32, %c0_i32_0 : i32, i32
  }
  func.func @transform_7(%arg0: i32) -> (i32, i32) {
    %c0_i32 = arith.constant 0 : i32
    %c0_i32_0 = arith.constant 0 : i32
    %c0_i32_1 = arith.constant 0 : i32
    return %c0_i32, %c0_i32_0 : i32, i32
  }
  func.func @transform_8(%arg0: i32) -> (i32, i32) {
    %c0_i32 = arith.constant 0 : i32
    %c0_i32_0 = arith.constant 0 : i32
    %c0_i32_1 = arith.constant 0 : i32
    return %c0_i32, %c0_i32_0 : i32, i32
  }
  func.func @transform_9(%arg0: i32) -> (i32, i32) {
    %c0_i32 = arith.constant 0 : i32
    %c0_i32_0 = arith.constant 0 : i32
    return %arg0, %c0_i32 : i32, i32
  }
}

</mosaic_0001>

<llo_original>
// kernel: tpu_custom_call.1
$region0: #{tpu_custom_call.1}
  #allocation0 [shape = 'u32[]', space=smem, size = 0x4, offset = 0x4, fixed_abs, tag = 'smem constant byte address 0x4 - core index']
  #allocation1 [shape = 'u32[72,128]{1,0:T(1,128)}', space=vmem, size = 0x9000, scoped, tag = 'internal scratch']
  #allocation2 [shape = 'f32[1,1]{1,0:T(1,128)S(6)}', space=smem, size = 0x200, scoped, tag = 'scoped memory for tpu_custom_call.1']
  %s0 = inlined_call_operand.vmem [shape: f32[16,32], index: 0, kind: input, shape index: {}]
  %s1 = inlined_call_operand.vmem [shape: f32[16,16], index: 1, kind: input, shape index: {}]
  %s2 = inlined_call_operand.vmem [shape: f32[32,64], index: 2, kind: input, shape index: {}]
  %s3 = inlined_call_operand.vmem [shape: f32[16,64], index: 3, kind: input, shape index: {}]
  %s4 = inlined_call_operand.vmem [shape: f32[1,64], index: 4, kind: input, shape index: {}]
  %s5 = inlined_call_operand.vmem [shape: f32[64,32], index: 5, kind: input, shape index: {}]
  %s6 = inlined_call_operand.vmem [shape: f32[1,32], index: 6, kind: input, shape index: {}]
  %s7 = inlined_call_operand.vmem [shape: f32[1,32], index: 7, kind: input, shape index: {}]
  %s8 = inlined_call_operand.<no memory space> [shape: f32[1,1], index: 8, kind: input, shape index: {}]
  %s9 = inlined_call_operand.hbm [shape: f32[1,16], index: 9, kind: output, shape index: {}]
  %s10 = sld [smem:[#allocation0]]
  $region46: #{tpu_custom_call.1} parent=0
    _
  %s12 = ssub.s32 1, %s10
  %s13 = scalar_select 0, %s12, %s10
  %14 = sst [smem:[#allocation2]] %s8
  $region1: #{tpu_custom_call.1} parent=0
    #allocation3 [shape = 'u8[512]{0}', space=vmem, size = 0x400, scoped, tag = 'output window, operand 0, single buffered']
    #allocation4 [shape = 's32[1]{0}', space=sflag, size = 0x4, scoped, tag = 'scoped memory for tpu_custom_call.1']
    %15 = vsyncpa [#allocation4], 0
    // Predicated region
    $region2: #{tpu_custom_call.1} parent=1 // pred_check
      _
    $region3: #{tpu_custom_call.1} parent=1 // pred_check_branch
      %17 = sbr.rel (0) target = $region5
    $region4: #{tpu_custom_call.1} parent=1 // pred_region
      _
    $region5: #{tpu_custom_call.1} parent=1 // pred_fallthru
      _
    // Predicated region
    $region6: #{tpu_custom_call.1} parent=1 // pred_check
      _
    $region7: #{tpu_custom_call.1} parent=1 // pred_check_branch
      %19 = sbr.rel (0) target = $region9
    $region8: #{tpu_custom_call.1} parent=1 // pred_region
      _
    $region9: #{tpu_custom_call.1} parent=1 // pred_fallthru
      _
    // Predicated region
    $region10: #{tpu_custom_call.1} parent=1 // pred_check
      _
    $region11: #{tpu_custom_call.1} parent=1 // pred_check_branch
      %21 = sbr.rel (0) target = $region13
    $region12: #{tpu_custom_call.1} parent=1 // pred_region
      _
    $region13: #{tpu_custom_call.1} parent=1 // pred_fallthru
      _
    // Predicated region
    $region14: #{tpu_custom_call.1} parent=1 // pred_check
      _
    $region15: #{tpu_custom_call.1} parent=1 // pred_check_branch
      %23 = sbr.rel (0) target = $region17
    $region16: #{tpu_custom_call.1} parent=1 // pred_region
      _
    $region17: #{tpu_custom_call.1} parent=1 // pred_fallthru
      _
    // Predicated region
    $region18: #{tpu_custom_call.1} parent=1 // pred_check
      _
    $region19: #{tpu_custom_call.1} parent=1 // pred_check_branch
      %25 = sbr.rel (0) target = $region21
    $region20: #{tpu_custom_call.1} parent=1 // pred_region
      _
    $region21: #{tpu_custom_call.1} parent=1 // pred_fallthru
      _
    // Predicated region
    $region22: #{tpu_custom_call.1} parent=1 // pred_check
      _
    $region23: #{tpu_custom_call.1} parent=1 // pred_check_branch
      %27 = sbr.rel (0) target = $region25
    $region24: #{tpu_custom_call.1} parent=1 // pred_region
      _
    $region25: #{tpu_custom_call.1} parent=1 // pred_fallthru
      _
    // Predicated region
    $region26: #{tpu_custom_call.1} parent=1 // pred_check
      _
    $region27: #{tpu_custom_call.1} parent=1 // pred_check_branch
      %29 = sbr.rel (0) target = $region29
    $region28: #{tpu_custom_call.1} parent=1 // pred_region
      _
    $region29: #{tpu_custom_call.1} parent=1 // pred_fallthru
      _
    // Predicated region
    $region30: #{tpu_custom_call.1} parent=1 // pred_check
      _
    $region31: #{tpu_custom_call.1} parent=1 // pred_check_branch
      %31 = sbr.rel (0) target = $region33
    $region32: #{tpu_custom_call.1} parent=1 // pred_region
      _
    $region33: #{tpu_custom_call.1} parent=1 // pred_fallthru
      _
    // Predicated region
    $region34: #{tpu_custom_call.1} parent=1 // pred_check
      _
    $region35: #{tpu_custom_call.1} parent=1 // pred_check_branch
      %33 = sbr.rel (0) target = $region37
    $region36: #{tpu_custom_call.1} parent=1 // pred_region
      _
    $region37: #{tpu_custom_call.1} parent=1 // pred_fallthru
      _
    %v34 = vld [vmem:[%s0] sm:$0xff]
    %v35 = vld [vmem:[%s0 + $0x8] sm:$0xff]
    %v36 = vld [vmem:[%s1] sm:$0xff]
    %v37 = vld [vmem:[%s1 + $0x8] sm:$0xff]
    %v38 = vld [vmem:[%s2] sm:$0xff]
    %v39 = vld [vmem:[%s2 + $0x8] sm:$0xff]
    %v40 = vld [vmem:[%s2 + $0x10] sm:$0xff]
    %v41 = vld [vmem:[%s2 + $0x18] sm:$0xff]
    %v42 = vld [vmem:[%s3] sm:$0xff]
    %v43 = vld [vmem:[%s3 + $0x8] sm:$0xff]
    %vm44 = vcmask 130048
    %v46 = vsel %vm44, %v36, 0
    %v49 = vsel %vm44, %v37, 0
    %51 = vmatpush.msra.mxu0 0.0
    %52 = vmatpush.msra.mxu0 0.0
    %53 = vmatpush.msra.mxu0 0.0
    %54 = vmatpush.msra.mxu0 0.0
    %55 = vmatpush.msra.mxu0 0.0
    %56 = vmatpush.msra.mxu0 0.0
    %57 = vmatpush.msra.mxu0 0.0
    %58 = vmatpush.msra.mxu0 0.0
    %59 = vmatpush.msra.mxu0 0.0
    %60 = vmatpush.msra.mxu0 0.0
    %61 = vmatpush.msra.mxu0 0.0
    %62 = vmatpush.msra.mxu0 0.0
    %63 = vmatpush.msra.mxu0 0.0
    %64 = vmatpush.msra.mxu0 0.0
    %65 = vmatpush.msra.mxu0 %v43
    %66 = vmatpush.msra.mxu0 %v42
    %67 = vmatmul.f32.gmra.mxu0 %v46
    %v68 = vpop.f32.mrf.mxu0
    %v69 = vadd.f32 0.0, %v68
    %70 = vmatmul.f32.gmra.mxu0 %v49
    %v71 = vpop.f32.mrf.mxu0
    %v72 = vadd.f32 0.0, %v71
    %73 = vdwg.mxu0
    %vm74 = vcmask 261120
    %v76 = vsel %vm74, %v34, 0
    %v79 = vsel %vm74, %v35, 0
    %81 = vmatpush.msra.mxu0 0.0
    %82 = vmatpush.msra.mxu0 0.0
    %83 = vmatpush.msra.mxu0 0.0
    %84 = vmatpush.msra.mxu0 0.0
    %85 = vmatpush.msra.mxu0 0.0
    %86 = vmatpush.msra.mxu0 0.0
    %87 = vmatpush.msra.mxu0 0.0
    %88 = vmatpush.msra.mxu0 0.0
    %89 = vmatpush.msra.mxu0 0.0
    %90 = vmatpush.msra.mxu0 0.0
    %91 = vmatpush.msra.mxu0 0.0
    %92 = vmatpush.msra.mxu0 0.0
    %93 = vmatpush.msra.mxu0 %v41
    %94 = vmatpush.msra.mxu0 %v40
    %95 = vmatpush.msra.mxu0 %v39
    %96 = vmatpush.msra.mxu0 %v38
    %97 = vmatmul.f32.gmra.mxu0 %v76
    %v98 = vpop.f32.mrf.mxu0
    %v99 = vadd.f32 %v69, %v98
    %100 = vmatmul.f32.gmra.mxu0 %v79
    %v101 = vpop.f32.mrf.mxu0
    %v102 = vadd.f32 %v72, %v101
    %103 = vdwg.mxu0
    %v104 = vld [vmem:[%s4] sm:$0x1]
    %v106 = vperm.slane %v104, 0
    %v108 = vadd.f32 %v99, %v106
    %v109 = vadd.f32 %v102, %v106
    %vm110 = vcmp.gt.f32.partialorder %v108, 0.0
    %vm111 = vcmp.gt.f32.partialorder %v109, 0.0
    %v112 = vmin.f32 %v108, 0.0
    %v113 = vmin.f32 %v109, 0.0
    %v114 = vmul.f32 %v112, 1.442695
    %v115 = vpow.pop %v114
    %v116 = vmul.f32 %v113, 1.442695
    %v117 = vpow.pop %v116
    %v118 = vsub.f32 %v115, 1.0
    %v119 = vsub.f32 %v117, 1.0
    %v120 = vmul.f32 %v118, 1.6732632
    %v121 = vmul.f32 %v119, 1.6732632
    %v122 = vsel %vm110, %v108, %v120
    %v123 = vsel %vm111, %v109, %v121
    %v124 = vmul.f32 %v122, 1.050701
    %v125 = vmul.f32 %v123, 1.050701
    %v126 = vld [vmem:[%s5] sm:$0xff]
    %v127 = vld [vmem:[%s5 + $0x8] sm:$0xff]
    %v128 = vld [vmem:[%s5 + $0x10] sm:$0xff]
    %v129 = vld [vmem:[%s5 + $0x18] sm:$0xff]
    %v130 = vld [vmem:[%s5 + $0x20] sm:$0xff]
    %v131 = vld [vmem:[%s5 + $0x28] sm:$0xff]
    %v132 = vld [vmem:[%s5 + $0x30] sm:$0xff]
    %v133 = vld [vmem:[%s5 + $0x38] sm:$0xff]
    %v134 = vld [vmem:[%s6] sm:$0x1]
    %v136 = vperm.slane %v134, 0
    %vm138 = vcmask 523264
    %v140 = vsel %vm138, %v124, 0
    %v143 = vsel %vm138, %v125, 0
    %145 = vmatpush.msra.mxu0 0.0
    %146 = vmatpush.msra.mxu0 0.0
    %147 = vmatpush.msra.mxu0 0.0
    %148 = vmatpush.msra.mxu0 0.0
    %149 = vmatpush.msra.mxu0 0.0
    %150 = vmatpush.msra.mxu0 0.0
    %151 = vmatpush.msra.mxu0 0.0
    %152 = vmatpush.msra.mxu0 0.0
    %153 = vmatpush.msra.mxu0 %v133
    %154 = vmatpush.msra.mxu0 %v132
    %155 = vmatpush.msra.mxu0 %v131
    %156 = vmatpush.msra.mxu0 %v130
    %157 = vmatpush.msra.mxu0 %v129
    %158 = vmatpush.msra.mxu0 %v128
    %159 = vmatpush.msra.mxu0 %v127
    %160 = vmatpush.msra.mxu0 %v126
    %161 = vmatmul.f32.gmra.mxu0 %v140
    %v162 = vpop.f32.mrf.mxu0
    %v163 = vadd.f32 %v136, %v162
    %164 = vmatmul.f32.gmra.mxu0 %v143
    %v165 = vpop.f32.mrf.mxu0
    %v166 = vadd.f32 %v136, %v165
    %167 = vdwg.mxu0
    %vm168 = vcmp.gt.f32.partialorder %v163, 0.0
    %vm169 = vcmp.gt.f32.partialorder %v166, 0.0
    %v170 = vmin.f32 %v163, 0.0
    %v171 = vmin.f32 %v166, 0.0
    %v172 = vmul.f32 %v170, 1.442695
    %v173 = vpow.pop %v172
    %v174 = vmul.f32 %v171, 1.442695
    %v175 = vpow.pop %v174
    %v176 = vsub.f32 %v173, 1.0
    %v177 = vsub.f32 %v175, 1.0
    %v178 = vmul.f32 %v176, 1.6732632
    %v179 = vmul.f32 %v177, 1.6732632
    %v180 = vsel %vm168, %v163, %v178
    %v181 = vsel %vm169, %v166, %v179
    %v182 = vmul.f32 %v180, 1.050701
    %v183 = vmul.f32 %v181, 1.050701
    %v184 = vld [vmem:[%s7] sm:$0x1]
    %s185 = sld [smem:[#allocation2]]
    %v186 = vstv %s185
    %v188 = vsel %vm74, %v184, 0
    %v191 = vsel %vm74, %v182, 0
    %v194 = vsel %vm74, %v183, 0
    %196 = vmatpush.xpose.msra.mxu0 0.0
    %197 = vmatpush.xpose.msra.mxu0 0.0
    %198 = vmatpush.xpose.msra.mxu0 0.0
    %199 = vmatpush.xpose.msra.mxu0 0.0
    %200 = vmatpush.xpose.msra.mxu0 0.0
    %201 = vmatpush.xpose.msra.mxu0 0.0
    %202 = vmatpush.xpose.msra.mxu0 0.0
    %203 = vmatpush.xpose.msra.mxu0 0.0
    %204 = vmatpush.xpose.msra.mxu0 0.0
    %205 = vmatpush.xpose.msra.mxu0 0.0
    %206 = vmatpush.xpose.msra.mxu0 0.0
    %207 = vmatpush.xpose.msra.mxu0 0.0
    %208 = vmatpush.xpose.msra.mxu0 0.0
    %209 = vmatpush.xpose.msra.mxu0 0.0
    %210 = vmatpush.xpose.msra.mxu0 %v194
    %211 = vmatpush.xpose.msra.mxu0 %v191
    %212 = vmatmul.f32.gmra.mxu0 %v188
    %v213 = vpop.f32.mrf.mxu0
    %v214 = vadd.f32 %v186, %v213
    %215 = vdwg.mxu0
    %vm216 = vcmask 122880
    %217 = vst.msk [vmem:[#allocation3] sm:$0x1] %vm216, %v214
    // Predicated region
    $region38: #{tpu_custom_call.1} parent=1 // pred_check
      _
    $region39: #{tpu_custom_call.1} parent=1 // pred_check_branch
      %219 = sbr.rel (0) target = $region41
    $region40: #{tpu_custom_call.1} parent=1 // pred_region
      %221 = vsyncadd [#allocation4], 0
      %s223 = sshll.u32 [#allocation3], 4
      %s224 = int_to_ptr.vmem [resolvable:$true] %s223
      %s225 = sshll.u32 %s9, 4
      %s226 = int_to_ptr.hbm [resolvable:$true] %s225
      %228 = dma.vmem_to_hbm [thread:$0]  %s224, 16, %s226, [#allocation4]
    $region41: #{tpu_custom_call.1} parent=1 // pred_fallthru
      _
    // Predicated region
    $region42: #{tpu_custom_call.1} parent=1 // pred_check
      _
    $region43: #{tpu_custom_call.1} parent=1 // pred_check_branch
      %230 = sbr.rel (0) target = $region45
    $region44: #{tpu_custom_call.1} parent=1 // pred_region
      %232 = dma.done [#allocation4], 16
    $region45: #{tpu_custom_call.1} parent=1 // pred_fallthru
      _
    %233 = vsyncpa [#allocation4], 1

</llo_original>
